<compile_context>
chip_gen: v6e
topology: v6e:2x2x1
jax: 0.10.0
libtpu: 0.0.40
codegen_flags: <defaults>
</compile_context>

<pallas_src>
import math

import jax
import jax.numpy as jnp
from jax.experimental import pallas as pl
from jax.experimental.pallas import tpu as pltpu


def _gelu_tanh(x):
    # PyTorch "gelu_pytorch_tanh": 0.5*x*(1+tanh(sqrt(2/pi)*(x+0.044715*x^3)))
    c = math.sqrt(2.0 / math.pi)
    return 0.5 * x * (1.0 + jnp.tanh(c * (x + 0.044715 * x * x * x)))


def _round_up(x, m):
    return ((x + m - 1) // m) * m


def _mlp_partial(x_ref, w1_ref, b1_ref, w2_ref):
    # fc1 chunk: [tm, H] @ [H, ti] -> f32 [tm, ti] on the MXU.
    h = jnp.dot(x_ref[...], w1_ref[...], preferred_element_type=jnp.float32)
    h = h + b1_ref[...]                       # bias in f32
    h = _gelu_tanh(h)                         # VPU/EUP, f32
    # fc2 partial product: [tm, ti] @ [ti, H] -> f32 [tm, H].
    return jnp.dot(h.astype(w2_ref.dtype), w2_ref[...],
                   preferred_element_type=jnp.float32)


def _siglip2_mlp_kernel_f32out(x_ref, w1_ref, b1_ref, w2_ref, b2_ref, o_ref):
    # f32 output: accumulate directly into the resident output block.
    j = pl.program_id(1)

    @pl.when(j == 0)
    def _init():
        o_ref[...] = jnp.zeros_like(o_ref)

    o_ref[...] += _mlp_partial(x_ref, w1_ref, b1_ref, w2_ref)

    @pl.when(j == pl.num_programs(1) - 1)
    def _finalize():
        o_ref[...] = o_ref[...] + b2_ref[...]


def _siglip2_mlp_kernel_scratch(x_ref, w1_ref, b1_ref, w2_ref, b2_ref, o_ref,
                                acc_ref):
    # Narrow output dtype: accumulate in a f32 VMEM scratch, cast at the end.
    j = pl.program_id(1)

    @pl.when(j == 0)
    def _init():
        acc_ref[...] = jnp.zeros_like(acc_ref)

    acc_ref[...] += _mlp_partial(x_ref, w1_ref, b1_ref, w2_ref)

    @pl.when(j == pl.num_programs(1) - 1)
    def _finalize():
        o_ref[...] = (acc_ref[...] + b2_ref[...]).astype(o_ref.dtype)


def _pick_inter_tile(i_pad, ti_target):
    """Largest multiple of 128 that divides i_pad exactly and is <= ti_target."""
    if i_pad <= ti_target:
        return i_pad
    n_lanes = i_pad // 128
    best = 128
    for d in range(1, n_lanes + 1):
        if n_lanes % d == 0:
            cand = d * 128
            if cand <= ti_target:
                best = cand
    return best


def siglip2_mlp(x, w1, b1, w2, b2, *, tm=1024, ti=2176,
                compute_dtype=jnp.bfloat16, min_token_tiles=1):
    """Siglip2 MLP: gelu_tanh(x @ w1 + b1) @ w2 + b2.

    x : [..., hidden]
    w1: [hidden, inter]   (transposed vs. torch nn.Linear weight)
    b1: [inter]
    w2: [inter, hidden]
    b2: [hidden]
    compute_dtype: dtype for x/w1/w2 on the MXU (default bf16; accumulation,
        biases and GELU stay float32).  Pass jnp.float32 for exact math.
    min_token_tiles: set >=2 on v7x (2 TensorCores) when the token count would
        otherwise produce a single token tile, so both cores get work.
    """
    orig_shape = x.shape
    hidden = orig_shape[-1]
    inter = w1.shape[1]
    out_dtype = x.dtype

    if compute_dtype is not None:
        x = x.astype(compute_dtype)
        w1 = w1.astype(compute_dtype)
        w2 = w2.astype(compute_dtype)
    b1 = b1.astype(jnp.float32)
    b2 = b2.astype(jnp.float32)

    x2d = x.reshape(-1, hidden)
    n_tok = x2d.shape[0]

    esz = jnp.dtype(x2d.dtype).itemsize
    osz = jnp.dtype(out_dtype).itemsize
    # bf16 packs 16 rows per sublane group; f32 packs 8.
    sublane = 16 if esz < 4 else 8

    # ---- token (M) tiling: balanced tiles, rounded to the sublane multiple ----
    num_tok_tiles = max(int(min_token_tiles), -(-n_tok // tm))
    tm_eff = _round_up(-(-n_tok // num_tok_tiles), sublane)
    n_pad = num_tok_tiles * tm_eff
    if n_pad != n_tok:
        x2d = jnp.pad(x2d, ((0, n_pad - n_tok), (0, 0)))

    # ---- intermediate tiling: pad to 128, tile divides the padded size ----
    i_pad = _round_up(inter, 128)
    ti_eff = _pick_inter_tile(i_pad, max(ti, 128))
    if i_pad != inter:
        # gelu_tanh(0) == 0 and padded w2 rows are zero => padding is exact.
        w1 = jnp.pad(w1, ((0, 0), (0, i_pad - inter)))
        b1 = jnp.pad(b1, ((0, i_pad - inter),))
        w2 = jnp.pad(w2, ((0, i_pad - inter), (0, 0)))

    b1_2d = b1.reshape(1, i_pad)
    b2_2d = b2.reshape(1, hidden)

    grid = (num_tok_tiles, i_pad // ti_eff)

    use_scratch = jnp.dtype(out_dtype) != jnp.dtype(jnp.float32)
    kernel = _siglip2_mlp_kernel_scratch if use_scratch else _siglip2_mlp_kernel_f32out
    scratch_shapes = ([pltpu.VMEM((tm_eff, hidden), jnp.float32)]
                      if use_scratch else [])

    # Per-step VMEM: double-buffered pipeline blocks (+ f32 scratch if any).
    block_bytes = (tm_eff * hidden * esz      # x block
                   + hidden * ti_eff * esz    # w1 block
                   + ti_eff * 4               # b1 block
                   + ti_eff * hidden * esz    # w2 block
                   + hidden * 4               # b2 block
                   + tm_eff * hidden * osz)   # out block
    vmem_bytes = 2 * block_bytes
    if use_scratch:
        vmem_bytes += tm_eff * hidden * 4
    try:
        vmem_cap = int(pltpu.get_tpu_info().vmem_capacity_bytes)
    except Exception:
        vmem_cap = 64 << 20                   # v7x per-TensorCore capacity
    vmem_limit = min(max(vmem_bytes + (4 << 20), 32 << 20), vmem_cap)

    # Weights are re-streamed once per token tile (index_maps depend only on j).
    w_bytes = (hidden * i_pad + i_pad * hidden) * esz
    cost = pl.CostEstimate(
        flops=int(4 * n_pad * hidden * i_pad),              # two matmuls
        transcendentals=int(n_pad * i_pad),                 # tanh in GELU
        bytes_accessed=int(n_pad * hidden * esz             # x
                           + grid[0] * w_bytes              # w1+w2 per token tile
                           + i_pad * 4 + hidden * 4         # biases
                           + n_pad * hidden * osz),         # out
    )

    out = pl.pallas_call(
        kernel,
        out_shape=jax.ShapeDtypeStruct((n_pad, hidden), out_dtype),
        grid_spec=pltpu.PrefetchScalarGridSpec(
            num_scalar_prefetch=0,
            grid=grid,
            in_specs=[
                pl.BlockSpec((tm_eff, hidden), lambda i, j: (i, 0)),   # x
                pl.BlockSpec((hidden, ti_eff), lambda i, j: (0, j)),   # w1
                pl.BlockSpec((1, ti_eff), lambda i, j: (0, j)),        # b1
                pl.BlockSpec((ti_eff, hidden), lambda i, j: (j, 0)),   # w2
                pl.BlockSpec((1, hidden), lambda i, j: (0, 0)),        # b2
            ],
            out_specs=pl.BlockSpec((tm_eff, hidden), lambda i, j: (i, 0)),
            scratch_shapes=scratch_shapes,
        ),
        compiler_params=pltpu.CompilerParams(
            dimension_semantics=("parallel", "arbitrary"),
            vmem_limit_bytes=int(vmem_limit),
        ),
        cost_estimate=cost,
    )(x2d, w1, b1_2d, w2, b2_2d)

    out = out[:n_tok]
    return out.reshape(orig_shape).astype(out_dtype)


if __name__ == "__main__":
    # Small synthetic config: hidden_size=32, intermediate_size=128,
    # batch=2, seq=8  ->  16 tokens.
    hidden_size = 32
    intermediate_size = 128
    batch, seq = 2, 8

    key = jax.random.PRNGKey(0)
    kx, k1, kb1, k2, kb2 = jax.random.split(key, 5)

    x = jax.random.normal(kx, (batch, seq, hidden_size), dtype=jnp.float32)
    # fc1: Linear(hidden -> intermediate); stored transposed [in, out]
    w1 = jax.random.normal(k1, (hidden_size, intermediate_size),
                           dtype=jnp.float32) * (1.0 / math.sqrt(hidden_size))
    b1 = jax.random.normal(kb1, (intermediate_size,), dtype=jnp.float32) * 0.01
    # fc2: Linear(intermediate -> hidden); stored transposed [in, out]
    w2 = jax.random.normal(k2, (intermediate_size, hidden_size),
                           dtype=jnp.float32) * (1.0 / math.sqrt(intermediate_size))
    b2 = jax.random.normal(kb2, (hidden_size,), dtype=jnp.float32) * 0.01

    # Pure-JAX reference (same math, outside the kernel).
    y_ref = _gelu_tanh(x @ w1 + b1) @ w2 + b2

    # 1) Exact f32 path, tight tolerance (single reduction step).
    y = jax.block_until_ready(
        siglip2_mlp(x, w1, b1, w2, b2, compute_dtype=jnp.float32))
    assert y.shape == (batch, seq, hidden_size)
    assert jnp.allclose(y, y_ref, atol=1e-5, rtol=1e-5), "f32 mismatch"

    # 2) Default bf16 compute path (production default), looser tolerance.
    y_bf = jax.block_until_ready(siglip2_mlp(x, w1, b1, w2, b2))
    assert jnp.allclose(y_bf, y_ref, atol=5e-2, rtol=5e-2), "bf16 mismatch"

    # 3) Ragged token count (exercises balanced-tile padding path), exact f32.
    x_odd = x[:1, :5]
    y_odd = jax.block_until_ready(
        siglip2_mlp(x_odd, w1, b1, w2, b2, compute_dtype=jnp.float32))
    y_odd_ref = _gelu_tanh(x_odd @ w1 + b1) @ w2 + b2
    assert jnp.allclose(y_odd, y_odd_ref, atol=1e-5, rtol=1e-5), "ragged mismatch"

    # 4) Multi-step reduction + multi token tiles (grid (2,2)), f32 output path
    #    accumulating directly into the resident output block.
    inter2 = 256
    w1b = jax.random.normal(k1, (hidden_size, inter2), dtype=jnp.float32) * 0.1
    b1b = jax.random.normal(kb1, (inter2,), dtype=jnp.float32) * 0.01
    w2b = jax.random.normal(k2, (inter2, hidden_size), dtype=jnp.float32) * 0.1
    b2b = jax.random.normal(kb2, (hidden_size,), dtype=jnp.float32) * 0.01
    y2_ref = _gelu_tanh(x @ w1b + b1b) @ w2b + b2b
    y2 = jax.block_until_ready(
        siglip2_mlp(x, w1b, b1b, w2b, b2b, tm=8, ti=128,
                    compute_dtype=jnp.float32))
    assert jnp.allclose(y2, y2_ref, atol=1e-5, rtol=1e-5), "grid(2,2) mismatch"

    # 5) bf16 output dtype -> f32 VMEM scratch accumulator path, 2 reduction steps.
    x_bf16 = x.astype(jnp.bfloat16)
    y3 = jax.block_until_ready(
        siglip2_mlp(x_bf16, w1b, b1b, w2b, b2b, ti=128))
    assert y3.dtype == jnp.bfloat16
    assert jnp.allclose(y3.astype(jnp.float32), y2_ref, atol=1e-1, rtol=1e-1), \
        "bf16-out scratch-path mismatch"

    # TODO(synk): tensor-parallel sharding (Column/RowParallelLinear) and
    # quant_config (bitsandbytes) paths are not modeled; single-device MLP only.
    print("KERNEL_OK")
</pallas_src>

<mosaic_0001>
module attributes {stable_mosaic.version = 11 : i64} {
  func.func @_siglip2_mlp_kernel_f32out(%arg0: i32, %arg1: i32, %arg2: memref<16x32xf32, #tpu.memory_space<vmem>>, %arg3: memref<32x128xf32, #tpu.memory_space<vmem>>, %arg4: memref<1x128xf32, #tpu.memory_space<vmem>>, %arg5: memref<128x32xf32, #tpu.memory_space<vmem>>, %arg6: memref<1x32xf32, #tpu.memory_space<vmem>>, %arg7: memref<16x32xf32, #tpu.memory_space<vmem>>) attributes {dimension_semantics = [#tpu.dimension_semantics<parallel>, #tpu.dimension_semantics<arbitrary>], iteration_bounds = array<i64: 1, 1>, scalar_prefetch = 0 : i64, scratch_operands = 0 : i64, tpu.core_type = #tpu.core_type<tc>, window_params = [{transform_indices = @transform_0, window_bounds = array<i64: 16, 32>}, {transform_indices = @transform_1, window_bounds = array<i64: 32, 128>}, {transform_indices = @transform_2, window_bounds = array<i64: 1, 128>}, {transform_indices = @transform_3, window_bounds = array<i64: 128, 32>}, {pipeline_mode = #tpu.pipeline_mode<synchronous>, transform_indices = @transform_4, window_bounds = array<i64: 1, 32>}, {transform_indices = @transform_5, window_bounds = array<i64: 16, 32>}]} {
    %c0_i32 = arith.constant 0 : i32
    %0 = arith.cmpi eq, %arg1, %c0_i32 : i32
    %1 = arith.extui %0 : i1 to i32
    %c0_i32_0 = arith.constant 0 : i32
    %2 = arith.cmpi ne, %1, %c0_i32_0 : i32
    scf.if %2 {
      %cst_19 = arith.constant 0.000000e+00 : f32
      %30 = vector.broadcast %cst_19 : f32 to vector<16x32xf32>
      %c0_20 = arith.constant 0 : index
      %c0_21 = arith.constant 0 : index
      %31 = vector.load %arg7[%c0_20, %c0_21] : memref<16x32xf32, #tpu.memory_space<vmem>>, vector<16x32xf32>
      tpu.vector_store %arg7[%c0_20, %c0_21], %30 {strides = array<i32>} : memref<16x32xf32, #tpu.memory_space<vmem>>, vector<16x32xf32>,
    } else {
    }
    %c0 = arith.constant 0 : index
    %c0_1 = arith.constant 0 : index
    %3 = vector.load %arg7[%c0, %c0_1] : memref<16x32xf32, #tpu.memory_space<vmem>>, vector<16x32xf32>
    %c0_2 = arith.constant 0 : index
    %c0_3 = arith.constant 0 : index
    %4 = vector.load %arg2[%c0_2, %c0_3] : memref<16x32xf32, #tpu.memory_space<vmem>>, vector<16x32xf32>
    %c0_4 = arith.constant 0 : index
    %c0_5 = arith.constant 0 : index
    %5 = vector.load %arg3[%c0_4, %c0_5] : memref<32x128xf32, #tpu.memory_space<vmem>>, vector<32x128xf32>
    %cst = arith.constant dense<0.000000e+00> : vector<16x128xf32>
    %6 = tpu.matmul %4, %5, %cst {dimension_numbers = #tpu.dot_dimension_numbers<[1], [0], [0], [1], [0, 0, 1, 1], [], []>} : vector<16x32xf32>, vector<32x128xf32>, vector<16x128xf32> -> vector<16x128xf32>
    %c0_6 = arith.constant 0 : index
    %c0_7 = arith.constant 0 : index
    %7 = vector.load %arg4[%c0_6, %c0_7] : memref<1x128xf32, #tpu.memory_space<vmem>>, vector<1x128xf32>
    %8 = vector.broadcast %7 : vector<1x128xf32> to vector<16x128xf32>
    %9 = arith.addf %6, %8 : vector<16x128xf32>
    %cst_8 = arith.constant 5.000000e-01 : f32
    %10 = vector.broadcast %cst_8 : f32 to vector<16x128xf32>
    %11 = arith.mulf %10, %9 : vector<16x128xf32>
    %cst_9 = arith.constant 4.471500e-02 : f32
    %12 = vector.broadcast %cst_9 : f32 to vector<16x128xf32>
    %13 = arith.mulf %12, %9 : vector<16x128xf32>
    %14 = arith.mulf %13, %9 : vector<16x128xf32>
    %15 = arith.mulf %14, %9 : vector<16x128xf32>
    %16 = arith.addf %9, %15 : vector<16x128xf32>
    %cst_10 = arith.constant 0.797884583 : f32
    %17 = vector.broadcast %cst_10 : f32 to vector<16x128xf32>
    %18 = arith.mulf %17, %16 : vector<16x128xf32>
    %19 = math.tanh %18 : vector<16x128xf32>
    %cst_11 = arith.constant 1.000000e+00 : f32
    %20 = vector.broadcast %cst_11 : f32 to vector<16x128xf32>
    %21 = arith.addf %20, %19 : vector<16x128xf32>
    %22 = arith.mulf %11, %21 : vector<16x128xf32>
    %c0_12 = arith.constant 0 : index
    %c0_13 = arith.constant 0 : index
    %23 = vector.load %arg5[%c0_12, %c0_13] : memref<128x32xf32, #tpu.memory_space<vmem>>, vector<128x32xf32>
    %cst_14 = arith.constant dense<0.000000e+00> : vector<16x32xf32>
    %24 = tpu.matmul %22, %23, %cst_14 {dimension_numbers = #tpu.dot_dimension_numbers<[1], [0], [0], [1], [0, 0, 1, 1], [], []>} : vector<16x128xf32>, vector<128x32xf32>, vector<16x32xf32> -> vector<16x32xf32>
    %25 = arith.addf %3, %24 : vector<16x32xf32>
    %c0_15 = arith.constant 0 : index
    %c0_16 = arith.constant 0 : index
    %26 = vector.load %arg7[%c0_15, %c0_16] : memref<16x32xf32, #tpu.memory_space<vmem>>, vector<16x32xf32>
    tpu.vector_store %arg7[%c0_15, %c0_16], %25 {strides = array<i32>} : memref<16x32xf32, #tpu.memory_space<vmem>>, vector<16x32xf32>,
    %c0_i32_17 = arith.constant 0 : i32
    %27 = arith.cmpi eq, %arg1, %c0_i32_17 : i32
    %28 = arith.extui %27 : i1 to i32
    %c0_i32_18 = arith.constant 0 : i32
    %29 = arith.cmpi ne, %28, %c0_i32_18 : i32
    scf.if %29 {
      %c0_19 = arith.constant 0 : index
      %c0_20 = arith.constant 0 : index
      %30 = vector.load %arg7[%c0_19, %c0_20] : memref<16x32xf32, #tpu.memory_space<vmem>>, vector<16x32xf32>
      %c0_21 = arith.constant 0 : index
      %c0_22 = arith.constant 0 : index
      %31 = vector.load %arg6[%c0_21, %c0_22] : memref<1x32xf32, #tpu.memory_space<vmem>>, vector<1x32xf32>
      %32 = vector.broadcast %31 : vector<1x32xf32> to vector<16x32xf32>
      %33 = arith.addf %30, %32 : vector<16x32xf32>
      %c0_23 = arith.constant 0 : index
      %c0_24 = arith.constant 0 : index
      %34 = vector.load %arg7[%c0_23, %c0_24] : memref<16x32xf32, #tpu.memory_space<vmem>>, vector<16x32xf32>
      tpu.vector_store %arg7[%c0_23, %c0_24], %33 {strides = array<i32>} : memref<16x32xf32, #tpu.memory_space<vmem>>, vector<16x32xf32>,
    } else {
    }
    return
  }
  func.func @transform_0(%arg0: i32, %arg1: i32) -> (i32, i32) {
    %c0_i32 = arith.constant 0 : i32
    %c0_i32_0 = arith.constant 0 : i32
    return %arg0, %c0_i32 : i32, i32
  }
  func.func @transform_1(%arg0: i32, %arg1: i32) -> (i32, i32) {
    %c0_i32 = arith.constant 0 : i32
    %c0_i32_0 = arith.constant 0 : i32
    return %c0_i32, %arg1 : i32, i32
  }
  func.func @transform_2(%arg0: i32, %arg1: i32) -> (i32, i32) {
    %c0_i32 = arith.constant 0 : i32
    %c0_i32_0 = arith.constant 0 : i32
    return %c0_i32, %arg1 : i32, i32
  }
  func.func @transform_3(%arg0: i32, %arg1: i32) -> (i32, i32) {
    %c0_i32 = arith.constant 0 : i32
    %c0_i32_0 = arith.constant 0 : i32
    return %arg1, %c0_i32 : i32, i32
  }
  func.func @transform_4(%arg0: i32, %arg1: i32) -> (i32, i32) {
    %c0_i32 = arith.constant 0 : i32
    %c0_i32_0 = arith.constant 0 : i32
    %c0_i32_1 = arith.constant 0 : i32
    return %c0_i32, %c0_i32_0 : i32, i32
  }
  func.func @transform_5(%arg0: i32, %arg1: i32) -> (i32, i32) {
    %c0_i32 = arith.constant 0 : i32
    %c0_i32_0 = arith.constant 0 : i32
    return %arg0, %c0_i32 : i32, i32
  }
}

</mosaic_0001>

<llo_original>
// kernel: tpu_custom_call.1
$region0: #{tpu_custom_call.1}
  #allocation0 [shape = 'u32[]', space=smem, size = 0x4, offset = 0x4, fixed_abs, tag = 'smem constant byte address 0x4 - core index']
  #allocation1 [shape = 'u32[144,128]{1,0:T(1,128)}', space=vmem, size = 0x12000, scoped, tag = 'internal scratch']
  %s0 = inlined_call_operand.vmem [shape: f32[16,32], index: 0, kind: input, shape index: {}]
  %s1 = inlined_call_operand.vmem [shape: f32[32,128], index: 1, kind: input, shape index: {}]
  %s2 = inlined_call_operand.vmem [shape: f32[1,128], index: 2, kind: input, shape index: {}]
  %s3 = inlined_call_operand.vmem [shape: f32[128,32], index: 3, kind: input, shape index: {}]
  %s4 = inlined_call_operand.vmem [shape: f32[1,32], index: 4, kind: input, shape index: {}]
  %s5 = inlined_call_operand.hbm [shape: f32[16,32], index: 5, kind: output, shape index: {}]
  %s6 = sld [smem:[#allocation0]]
  $region38: #{tpu_custom_call.1} parent=0
    _
  %s8 = ssub.s32 1, %s6
  %s9 = scalar_select 0, %s8, %s6
  $region1: #{tpu_custom_call.1} parent=0
    #allocation2 [shape = 'u8[8192]{0}', space=vmem, size = 0x2000, scoped, tag = 'output window, operand 0, single buffered']
    #allocation3 [shape = 's32[1]{0}', space=sflag, size = 0x4, scoped, tag = 'scoped memory for tpu_custom_call.1']
    %10 = vsyncpa [#allocation3], 0
    // Predicated region
    $region2: #{tpu_custom_call.1} parent=1 // pred_check
      _
    $region3: #{tpu_custom_call.1} parent=1 // pred_check_branch
      %12 = sbr.rel (0) target = $region5
    $region4: #{tpu_custom_call.1} parent=1 // pred_region
      _
    $region5: #{tpu_custom_call.1} parent=1 // pred_fallthru
      _
    // Predicated region
    $region6: #{tpu_custom_call.1} parent=1 // pred_check
      _
    $region7: #{tpu_custom_call.1} parent=1 // pred_check_branch
      %14 = sbr.rel (0) target = $region9
    $region8: #{tpu_custom_call.1} parent=1 // pred_region
      _
    $region9: #{tpu_custom_call.1} parent=1 // pred_fallthru
      _
    // Predicated region
    $region10: #{tpu_custom_call.1} parent=1 // pred_check
      _
    $region11: #{tpu_custom_call.1} parent=1 // pred_check_branch
      %16 = sbr.rel (0) target = $region13
    $region12: #{tpu_custom_call.1} parent=1 // pred_region
      _
    $region13: #{tpu_custom_call.1} parent=1 // pred_fallthru
      _
    // Predicated region
    $region14: #{tpu_custom_call.1} parent=1 // pred_check
      _
    $region15: #{tpu_custom_call.1} parent=1 // pred_check_branch
      %18 = sbr.rel (0) target = $region17
    $region16: #{tpu_custom_call.1} parent=1 // pred_region
      _
    $region17: #{tpu_custom_call.1} parent=1 // pred_fallthru
      _
    // Predicated region
    $region18: #{tpu_custom_call.1} parent=1 // pred_check
      _
    $region19: #{tpu_custom_call.1} parent=1 // pred_check_branch
      %20 = sbr.rel (0) target = $region21
    $region20: #{tpu_custom_call.1} parent=1 // pred_region
      _
    $region21: #{tpu_custom_call.1} parent=1 // pred_fallthru
      _
    %p21 = scmp.eq.s32.totalorder 0, 0
    // Predicated region
    $region22: #{tpu_custom_call.1} parent=1 // pred_check
      %p22 = pneg %p21
    $region23: #{tpu_custom_call.1} parent=1 // pred_check_branch
      %24 = sbr.rel (%p22) target = $region25
    $region24: #{tpu_custom_call.1} parent=1 // pred_region
      %vm25 = vcmask 261120
      %26 = vst.msk [vmem:[#allocation2] sm:$0xff] %vm25, 0.0
      %27 = vst.msk [vmem:[#allocation2 + $0x8] sm:$0xff] %vm25, 0.0
    $region25: #{tpu_custom_call.1} parent=1 // pred_fallthru
      _
    %v28 = vld [vmem:[#allocation2] sm:$0xff]
    %v29 = vld [vmem:[#allocation2 + $0x8] sm:$0xff]
    %v30 = vld [vmem:[%s0] sm:$0xff]
    %v31 = vld [vmem:[%s0 + $0x8] sm:$0xff]
    %v32 = vld [vmem:[%s1] sm:$0xff]
    %v33 = vld [vmem:[%s1 + $0x8] sm:$0xff]
    %v34 = vld [vmem:[%s1 + $0x10] sm:$0xff]
    %v35 = vld [vmem:[%s1 + $0x18] sm:$0xff]
    %v36 = vld [vmem:[%s2] sm:$0x1]
    %v38 = vlaneseq
    %v39 = vshrl.u32 %v38, 7
    %v40 = vsub.s32 0, %v39
    %v41 = vrot.slane %v36, %v40
    %vm43 = vcmask 261120
    %v45 = vsel %vm43, %v30, 0
    %v48 = vsel %vm43, %v31, 0
    %50 = vmatprep.subr.mxu0 0.0
    %51 = vmatpush1.msra.mxu0 0.0
    %52 = vmatprep.subr.mxu0 0.0
    %53 = vmatpush1.msra.mxu0 0.0
    %54 = vmatprep.subr.mxu0 0.0
    %55 = vmatpush1.msra.mxu0 0.0
    %56 = vmatprep.subr.mxu0 0.0
    %57 = vmatpush1.msra.mxu0 0.0
    %58 = vmatprep.subr.mxu0 0.0
    %59 = vmatpush1.msra.mxu0 0.0
    %60 = vmatprep.subr.mxu0 0.0
    %61 = vmatpush1.msra.mxu0 0.0
    %62 = vmatprep.subr.mxu0 0.0
    %63 = vmatpush1.msra.mxu0 0.0
    %64 = vmatprep.subr.mxu0 0.0
    %65 = vmatpush1.msra.mxu0 0.0
    %66 = vmatprep.subr.mxu0 0.0
    %67 = vmatpush1.msra.mxu0 0.0
    %68 = vmatprep.subr.mxu0 0.0
    %69 = vmatpush1.msra.mxu0 0.0
    %70 = vmatprep.subr.mxu0 0.0
    %71 = vmatpush1.msra.mxu0 0.0
    %72 = vmatprep.subr.mxu0 0.0
    %73 = vmatpush1.msra.mxu0 0.0
    %74 = vmatprep.subr.mxu0 0.0
    %75 = vmatpush1.msra.mxu0 %v35
    %76 = vmatprep.subr.mxu0 0.0
    %77 = vmatpush1.msra.mxu0 %v34
    %78 = vmatprep.subr.mxu0 0.0
    %79 = vmatpush1.msra.mxu0 %v33
    %80 = vmatprep.subr.mxu0 0.0
    %81 = vmatpush1.msra.mxu0 %v32
    %82 = vmatprep.subr.mxu0 0.0
    %83 = vmatpush2.msra.mxu0 0.0
    %84 = vmatprep.subr.mxu0 0.0
    %85 = vmatpush2.msra.mxu0 0.0
    %86 = vmatprep.subr.mxu0 0.0
    %87 = vmatpush2.msra.mxu0 0.0
    %88 = vmatprep.subr.mxu0 0.0
    %89 = vmatpush2.msra.mxu0 0.0
    %90 = vmatprep.subr.mxu0 0.0
    %91 = vmatpush2.msra.mxu0 0.0
    %92 = vmatprep.subr.mxu0 0.0
    %93 = vmatpush2.msra.mxu0 0.0
    %94 = vmatprep.subr.mxu0 0.0
    %95 = vmatpush2.msra.mxu0 0.0
    %96 = vmatprep.subr.mxu0 0.0
    %97 = vmatpush2.msra.mxu0 0.0
    %98 = vmatprep.subr.mxu0 0.0
    %99 = vmatpush2.msra.mxu0 0.0
    %100 = vmatprep.subr.mxu0 0.0
    %101 = vmatpush2.msra.mxu0 0.0
    %102 = vmatprep.subr.mxu0 0.0
    %103 = vmatpush2.msra.mxu0 0.0
    %104 = vmatprep.subr.mxu0 0.0
    %105 = vmatpush2.msra.mxu0 0.0
    %106 = vmatprep.subr.mxu0 0.0
    %107 = vmatpush2.msra.mxu0 0.0
    %108 = vmatprep.subr.mxu0 0.0
    %109 = vmatpush2.msra.mxu0 0.0
    %110 = vmatprep.subr.mxu0 0.0
    %111 = vmatpush2.msra.mxu0 0.0
    %112 = vmatprep.subr.mxu0 0.0
    %113 = vmatpush2.msra.mxu0 0.0
    %114 = vmatprep.mubr.f32.mxu0 0.0
    %115 = vmatmul.mubr.f32.gmra.mxu0 %v45
    %v116 = vpop.f32.mrf.mxu0
    %v117 = vadd.f32 %v41, %v116
    %v118 = vpop.f32.mrf.mxu0
    %119 = vmatprep.mubr.f32.mxu0 0.0
    %120 = vmatmul.mubr.f32.gmra.mxu0 %v48
    %v121 = vpop.f32.mrf.mxu0
    %v122 = vadd.f32 %v41, %v121
    %v123 = vpop.f32.mrf.mxu0
    %124 = vdwg.mxu0
    %v125 = vmul.f32 %v117, 0.5
    %v126 = vmul.f32 %v122, 0.5
    %v127 = vmul.f32 %v117, 0.044715
    %v128 = vmul.f32 %v122, 0.044715
    %v129 = vmul.f32 %v127, %v117
    %v130 = vmul.f32 %v128, %v122
    %v131 = vmul.f32 %v129, %v117
    %v132 = vmul.f32 %v130, %v122
    %v133 = vadd.f32 %v117, %v131
    %v134 = vadd.f32 %v122, %v132
    %v135 = vmul.f32 %v133, 0.7978846
    %v136 = vmul.f32 %v134, 0.7978846
    %v137 = vtanh.pop %v135
    %v138 = vtanh.pop %v136
    %v139 = vadd.f32 %v137, 1.0
    %v140 = vadd.f32 %v138, 1.0
    %v141 = vmul.f32 %v125, %v139
    %v142 = vmul.f32 %v126, %v140
    %v143 = vld [vmem:[%s3] sm:$0xff]
    %v144 = vld [vmem:[%s3 + $0x8] sm:$0xff]
    %v145 = vld [vmem:[%s3 + $0x10] sm:$0xff]
    %v146 = vld [vmem:[%s3 + $0x18] sm:$0xff]
    %v147 = vld [vmem:[%s3 + $0x20] sm:$0xff]
    %v148 = vld [vmem:[%s3 + $0x28] sm:$0xff]
    %v149 = vld [vmem:[%s3 + $0x30] sm:$0xff]
    %v150 = vld [vmem:[%s3 + $0x38] sm:$0xff]
    %v151 = vld [vmem:[%s3 + $0x40] sm:$0xff]
    %v152 = vld [vmem:[%s3 + $0x48] sm:$0xff]
    %v153 = vld [vmem:[%s3 + $0x50] sm:$0xff]
    %v154 = vld [vmem:[%s3 + $0x58] sm:$0xff]
    %v155 = vld [vmem:[%s3 + $0x60] sm:$0xff]
    %v156 = vld [vmem:[%s3 + $0x68] sm:$0xff]
    %v157 = vld [vmem:[%s3 + $0x70] sm:$0xff]
    %v158 = vld [vmem:[%s3 + $0x78] sm:$0xff]
    %159 = vmatprep.subr.mxu0 0.0
    %160 = vmatpush1.msra.mxu0 %v158
    %161 = vmatprep.subr.mxu0 0.0
    %162 = vmatpush1.msra.mxu0 %v157
    %163 = vmatprep.subr.mxu0 0.0
    %164 = vmatpush1.msra.mxu0 %v156
    %165 = vmatprep.subr.mxu0 0.0
    %166 = vmatpush1.msra.mxu0 %v155
    %167 = vmatprep.subr.mxu0 0.0
    %168 = vmatpush1.msra.mxu0 %v154
    %169 = vmatprep.subr.mxu0 0.0
    %170 = vmatpush1.msra.mxu0 %v153
    %171 = vmatprep.subr.mxu0 0.0
    %172 = vmatpush1.msra.mxu0 %v152
    %173 = vmatprep.subr.mxu0 0.0
    %174 = vmatpush1.msra.mxu0 %v151
    %175 = vmatprep.subr.mxu0 0.0
    %176 = vmatpush1.msra.mxu0 %v150
    %177 = vmatprep.subr.mxu0 0.0
    %178 = vmatpush1.msra.mxu0 %v149
    %179 = vmatprep.subr.mxu0 0.0
    %180 = vmatpush1.msra.mxu0 %v148
    %181 = vmatprep.subr.mxu0 0.0
    %182 = vmatpush1.msra.mxu0 %v147
    %183 = vmatprep.subr.mxu0 0.0
    %184 = vmatpush1.msra.mxu0 %v146
    %185 = vmatprep.subr.mxu0 0.0
    %186 = vmatpush1.msra.mxu0 %v145
    %187 = vmatprep.subr.mxu0 0.0
    %188 = vmatpush1.msra.mxu0 %v144
    %189 = vmatprep.subr.mxu0 0.0
    %190 = vmatpush1.msra.mxu0 %v143
    %191 = vmatprep.subr.mxu0 0.0
    %192 = vmatpush2.msra.mxu0 0.0
    %193 = vmatprep.subr.mxu0 0.0
    %194 = vmatpush2.msra.mxu0 0.0
    %195 = vmatprep.subr.mxu0 0.0
    %196 = vmatpush2.msra.mxu0 0.0
    %197 = vmatprep.subr.mxu0 0.0
    %198 = vmatpush2.msra.mxu0 0.0
    %199 = vmatprep.subr.mxu0 0.0
    %200 = vmatpush2.msra.mxu0 0.0
    %201 = vmatprep.subr.mxu0 0.0
    %202 = vmatpush2.msra.mxu0 0.0
    %203 = vmatprep.subr.mxu0 0.0
    %204 = vmatpush2.msra.mxu0 0.0
    %205 = vmatprep.subr.mxu0 0.0
    %206 = vmatpush2.msra.mxu0 0.0
    %207 = vmatprep.subr.mxu0 0.0
    %208 = vmatpush2.msra.mxu0 0.0
    %209 = vmatprep.subr.mxu0 0.0
    %210 = vmatpush2.msra.mxu0 0.0
    %211 = vmatprep.subr.mxu0 0.0
    %212 = vmatpush2.msra.mxu0 0.0
    %213 = vmatprep.subr.mxu0 0.0
    %214 = vmatpush2.msra.mxu0 0.0
    %215 = vmatprep.subr.mxu0 0.0
    %216 = vmatpush2.msra.mxu0 0.0
    %217 = vmatprep.subr.mxu0 0.0
    %218 = vmatpush2.msra.mxu0 0.0
    %219 = vmatprep.subr.mxu0 0.0
    %220 = vmatpush2.msra.mxu0 0.0
    %221 = vmatprep.subr.mxu0 0.0
    %222 = vmatpush2.msra.mxu0 0.0
    %223 = vmatprep.mubr.f32.mxu0 0.0
    %224 = vmatmul.mubr.f32.gmra.mxu0 %v141
    %v225 = vpop.f32.mrf.mxu0
    %v226 = vadd.f32 0.0, %v225
    %v227 = vpop.f32.mrf.mxu0
    %228 = vmatprep.mubr.f32.mxu0 0.0
    %229 = vmatmul.mubr.f32.gmra.mxu0 %v142
    %v230 = vpop.f32.mrf.mxu0
    %v231 = vadd.f32 0.0, %v230
    %v232 = vpop.f32.mrf.mxu0
    %233 = vdwg.mxu0
    %v234 = vadd.f32 %v28, %v226
    %v235 = vadd.f32 %v29, %v231
    %236 = vst.msk [vmem:[#allocation2] sm:$0xff] %vm43, %v234
    %237 = vst.msk [vmem:[#allocation2 + $0x8] sm:$0xff] %vm43, %v235
    // Predicated region
    $region26: #{tpu_custom_call.1} parent=1 // pred_check
      %p238 = pneg %p21
    $region27: #{tpu_custom_call.1} parent=1 // pred_check_branch
      %240 = sbr.rel (%p238) target = $region29
    $region28: #{tpu_custom_call.1} parent=1 // pred_region
      %v241 = vld [vmem:[#allocation2] sm:$0xff]
      %v242 = vld [vmem:[#allocation2 + $0x8] sm:$0xff]
      %v243 = vld [vmem:[%s4] sm:$0x1]
      %v245 = vlaneseq
      %v246 = vshrl.u32 %v245, 7
      %v247 = vsub.s32 0, %v246
      %v248 = vrot.slane %v243, %v247
      %v250 = vadd.f32 %v241, %v248
      %v251 = vadd.f32 %v242, %v248
      %252 = vst.msk [vmem:[#allocation2] sm:$0xff] %vm43, %v250
      %253 = vst.msk [vmem:[#allocation2 + $0x8] sm:$0xff] %vm43, %v251
    $region29: #{tpu_custom_call.1} parent=1 // pred_fallthru
      _
    // Predicated region
    $region30: #{tpu_custom_call.1} parent=1 // pred_check
      _
    $region31: #{tpu_custom_call.1} parent=1 // pred_check_branch
      %255 = sbr.rel (0) target = $region33
    $region32: #{tpu_custom_call.1} parent=1 // pred_region
      %s257 = ssub.s32 256, 256
      %258 = vsyncadd [#allocation3], %s257
      %s259 = sshll.u32 [#allocation2], 4
      %s260 = int_to_ptr.vmem [resolvable:$true] %s259
      %265 = dma.vmem_to_hbm [thread:$0]  %s260, 256, %s5, [#allocation3], 128, 128, 8
    $region33: #{tpu_custom_call.1} parent=1 // pred_fallthru
      _
    // Predicated region
    $region34: #{tpu_custom_call.1} parent=1 // pred_check
      _
    $region35: #{tpu_custom_call.1} parent=1 // pred_check_branch
      %267 = sbr.rel (0) target = $region37
    $region36: #{tpu_custom_call.1} parent=1 // pred_region
      %268 = dma.done [#allocation3], 256
    $region37: #{tpu_custom_call.1} parent=1 // pred_fallthru
      _
    %269 = vsyncpa [#allocation3], 1

</llo_original>
